<compile_context>
chip_gen: v5e
topology: v5e:2x2
jax: 0.10.0
libtpu: 0.0.40
codegen_flags: <defaults>
</compile_context>

<pallas_src>
import math

import jax
import jax.numpy as jnp
from jax.experimental import pallas as pl
from jax.experimental.pallas import tpu as pltpu  # noqa: F401  (TPU backend)

# ----------------------------- sizes --------------------------------------- #
B = 2              # batch
S = 8              # sequence length
BS = B * S         # fused row count
H = 32             # hidden size (model.config.hidden_size)
FF = 64            # feed-forward inner dim of the synthetic encoder
V = 64             # vocab size of the synthetic embedding
NUM_CLASSES = 2
C_PAD = 128        # lane-dense padded class / slab lane dim
SCALE = 1.0 / math.sqrt(H)

# --- bf16 weight slab layout (rows; all section starts are multiples of 8/16) --- #
WATT_ROW = 0               # (H, 2H): [Wqk | Wvo] in lanes 0:2H
W1_ROW = 32                # (H, FF)  in lanes 0:FF
W2_ROW = 64                # (FF, H)  in lanes 0:H
WFC_ROW = 128              # (H, C_PAD) pre-transposed head weight (cols >=2 are zero)
W_ROWS = 160

# --- f32 small slab layout ------------------------------------------------- #
LN_ROW = 0                 # rows 0..3: ln1_g, ln1_b, ln2_g, ln2_b in lanes 0:H
BFC_ROW = 8                # row 8: fc bias padded to C_PAD lanes
EMB_ROW = 16               # rows 16..16+V: embedding table in lanes 0:H
S_ROWS = EMB_ROW + V       # 80


def _layernorm(x, gamma, beta, eps=1e-6):
    # NOTE: eps=1e-6 full LayerNorm (synthetic backbone); differs from nn.LayerNorm(1e-5)
    # and from mT0/T5 RMSNorm — acceptable since the pretrained backbone is synthetic.
    mu = jnp.mean(x, axis=-1, keepdims=True)
    var = jnp.mean((x - mu) * (x - mu), axis=-1, keepdims=True)
    return (x - mu) * jax.lax.rsqrt(var + eps) * gamma + beta


def teacher_kernel(bias_ref, ids_ref, w_ref, s_ref, out_ref):
    # ---- embedding lookup: exact gather via one-hot MXU matmul ------------- #
    ids = ids_ref[...]                                          # (BS, 1) int32
    col = jax.lax.broadcasted_iota(jnp.int32, (BS, V), 1)
    onehot = (col == ids).astype(jnp.float32)                   # (BS, V)
    emb = s_ref[EMB_ROW:EMB_ROW + V, 0:H]                       # (V, H) f32
    x = jnp.dot(onehot, emb, preferred_element_type=jnp.float32)  # (BS, H) f32
    xb = x.astype(jnp.bfloat16)

    # ---- single-head self-attention with folded weights --------------------- #
    # One fused projection: [x·Wqk | x·Wvo]  where Wqk = wq·wkᵀ, Wvo = wv·wo.
    watt = w_ref[WATT_ROW:WATT_ROW + H, 0:2 * H]                # (H, 2H) bf16
    tu = jnp.dot(xb, watt, preferred_element_type=jnp.float32)  # (BS, 2H) f32
    t = tu[:, 0:H].astype(jnp.bfloat16)                         # x·Wqk
    u = tu[:, H:2 * H].astype(jnp.bfloat16)                     # x·Wvo

    # scores = (x·Wqk)·xᵀ : (1,1)-contraction uses the transposed-operand MXU path
    # (no explicit in-kernel transpose).  bias_ref already carries the block-diagonal
    # per-example structure + key-padding mask as 0 / -1e9.
    scores = jax.lax.dot_general(
        t, xb, (((1,), (1,)), ((), ())),
        preferred_element_type=jnp.float32) * SCALE + bias_ref[...]

    # NOTE: a fully-masked (all-zero attention_mask) example degenerates to a uniform
    # softmax over every key (matching the -1e9-bias reference semantics).
    scores = scores - jnp.max(scores, axis=-1, keepdims=True)
    p = jnp.exp(scores)
    # approx reciprocal runs on the otherwise-idle EUP slot (~1e-3 rel. error vs divide).
    p = p * pl.reciprocal(jnp.sum(p, axis=-1, keepdims=True), approx=True)

    attn = jnp.dot(p.astype(jnp.bfloat16), u,
                   preferred_element_type=jnp.float32)          # (BS, H) f32

    h = _layernorm(x + attn,
                   s_ref[LN_ROW + 0:LN_ROW + 1, 0:H],
                   s_ref[LN_ROW + 1:LN_ROW + 2, 0:H])

    # ---- feed-forward -------------------------------------------------------- #
    ff = jnp.dot(h.astype(jnp.bfloat16), w_ref[W1_ROW:W1_ROW + H, 0:FF],
                 preferred_element_type=jnp.float32)
    ff = jnp.maximum(ff, 0.0)
    ff = jnp.dot(ff.astype(jnp.bfloat16), w_ref[W2_ROW:W2_ROW + FF, 0:H],
                 preferred_element_type=jnp.float32)

    h2 = _layernorm(h + ff,
                    s_ref[LN_ROW + 2:LN_ROW + 3, 0:H],
                    s_ref[LN_ROW + 3:LN_ROW + 4, 0:H])          # last_hidden_state rows

    # ---- TeacherModel head ---------------------------------------------------- #
    # nn.Dropout in eval mode is the identity.
    # TODO(synk): training-mode dropout (PRNG mask) not emitted; eval semantics only.
    # Head applied to every row in one lane-dense (BS,H)@(H,128) MXU pass; the wrapper
    # selects the CLS rows [::S] and the real class columns [:2].
    logits = jnp.dot(h2.astype(jnp.bfloat16), w_ref[WFC_ROW:WFC_ROW + H, 0:C_PAD],
                     preferred_element_type=jnp.float32)
    out_ref[...] = logits + s_ref[BFC_ROW:BFC_ROW + 1, 0:C_PAD]


def prepare_params(params):
    """One-time preprocessing: weight folding, padding, bf16 casts, slab packing."""
    wqk = params["wq"] @ params["wk"].T                         # (H, H)  q·kᵀ fold
    wvo = params["wv"] @ params["wo"]                           # (H, H)  v·o fold
    watt = jnp.concatenate([wqk, wvo], axis=1)                  # (H, 2H)

    w_slab = jnp.zeros((W_ROWS, C_PAD), jnp.float32)
    w_slab = w_slab.at[WATT_ROW:WATT_ROW + H, 0:2 * H].set(watt)
    w_slab = w_slab.at[W1_ROW:W1_ROW + H, 0:FF].set(params["w1"])
    w_slab = w_slab.at[W2_ROW:W2_ROW + FF, 0:H].set(params["w2"])
    w_slab = w_slab.at[WFC_ROW:WFC_ROW + H, 0:NUM_CLASSES].set(params["fc_w"].T)
    w_slab = w_slab.astype(jnp.bfloat16)

    smalls = jnp.zeros((S_ROWS, C_PAD), jnp.float32)
    smalls = smalls.at[LN_ROW + 0, 0:H].set(params["ln1_g"][0])
    smalls = smalls.at[LN_ROW + 1, 0:H].set(params["ln1_b"][0])
    smalls = smalls.at[LN_ROW + 2, 0:H].set(params["ln2_g"][0])
    smalls = smalls.at[LN_ROW + 3, 0:H].set(params["ln2_b"][0])
    smalls = smalls.at[BFC_ROW, 0:NUM_CLASSES].set(params["fc_b"][0])
    smalls = smalls.at[EMB_ROW:EMB_ROW + V, 0:H].set(params["embedding"])

    row = jnp.arange(BS) // S
    blockdiag = row[:, None] == row[None, :]                    # (BS, BS) bool, static

    return {"weights": w_slab, "smalls": smalls, "blockdiag": blockdiag}


def teacher_forward(input_ids, attention_mask, prepared):
    """input_ids: (B, S) int32; attention_mask: (B, S) int/float; prepared: prepare_params()."""
    ids = input_ids.reshape(BS, 1).astype(jnp.int32)
    keep = jnp.logical_and(prepared["blockdiag"],
                           attention_mask.reshape(1, BS) > 0)   # (BS, BS)
    bias = jnp.where(keep, 0.0, -1e9).astype(jnp.float32)       # additive attention bias

    flops = (2 * BS * V * H            # one-hot embedding gather
             + 2 * BS * H * 2 * H      # fused [Wqk | Wvo] projection
             + 2 * BS * BS * H * 2     # scores + p@u
             + 2 * BS * H * FF * 2     # FFN
             + 2 * BS * H * C_PAD)     # head
    bytes_accessed = (4 * (BS * BS + BS + S_ROWS * C_PAD + BS * C_PAD)
                      + 2 * W_ROWS * C_PAD)
    cost = pl.CostEstimate(flops=flops,
                           transcendentals=BS * BS + 3 * BS,
                           bytes_accessed=bytes_accessed)

    out = pl.pallas_call(
        teacher_kernel,
        out_shape=jax.ShapeDtypeStruct((BS, C_PAD), jnp.float32),
        cost_estimate=cost,
    )(bias, ids, prepared["weights"], prepared["smalls"])

    # CLS token row of each example, real class columns.
    return out[::S, :NUM_CLASSES]                               # (B, 2)


def init_params(key):
    ks = jax.random.split(key, 10)
    s = 0.02
    return {
        "embedding": jax.random.normal(ks[0], (V, H), jnp.float32) * s,
        "wq": jax.random.normal(ks[1], (H, H), jnp.float32) * s,
        "wk": jax.random.normal(ks[2], (H, H), jnp.float32) * s,
        "wv": jax.random.normal(ks[3], (H, H), jnp.float32) * s,
        "wo": jax.random.normal(ks[4], (H, H), jnp.float32) * s,
        "w1": jax.random.normal(ks[5], (H, FF), jnp.float32) * s,
        "w2": jax.random.normal(ks[6], (FF, H), jnp.float32) * s,
        "ln1_g": jnp.ones((1, H), jnp.float32),
        "ln1_b": jnp.zeros((1, H), jnp.float32),
        "ln2_g": jnp.ones((1, H), jnp.float32),
        "ln2_b": jnp.zeros((1, H), jnp.float32),
        "fc_w": jax.random.normal(ks[7], (NUM_CLASSES, H), jnp.float32) * s,
        "fc_b": jnp.zeros((1, NUM_CLASSES), jnp.float32),
    }


if __name__ == "__main__":
    key = jax.random.PRNGKey(0)
    pkey, ikey = jax.random.split(key)
    params = init_params(pkey)
    prepared = prepare_params(params)          # one-time: folding / packing / bf16 casts

    input_ids = jax.random.randint(ikey, (B, S), 0, V, dtype=jnp.int32)
    attention_mask = jnp.ones((B, S), dtype=jnp.int32)

    logits = jax.jit(teacher_forward)(input_ids, attention_mask, prepared)
    jax.block_until_ready(logits)
    assert logits.shape == (B, NUM_CLASSES), logits.shape
    print("KERNEL_OK")
</pallas_src>

<mosaic_0001>
module attributes {stable_mosaic.version = 11 : i64} {
  func.func @teacher_kernel(%arg0: memref<16x16xf32, #tpu.memory_space<vmem>>, %arg1: memref<16x1xi32, #tpu.memory_space<vmem>>, %arg2: memref<160x128xbf16, #tpu.memory_space<vmem>>, %arg3: memref<80x128xf32, #tpu.memory_space<vmem>>, %arg4: memref<16x128xf32, #tpu.memory_space<vmem>>) attributes {dimension_semantics = [], scalar_prefetch = 0 : i64, scratch_operands = 0 : i64, tpu.core_type = #tpu.core_type<tc>} {
    %c0 = arith.constant 0 : index
    %c0_0 = arith.constant 0 : index
    %0 = vector.load %arg1[%c0, %c0_0] : memref<16x1xi32, #tpu.memory_space<vmem>>, vector<16x1xi32>
    %1 = tpu.iota {dimensions = array<i32: 1>} : vector<16x64xi32>
    %2 = vector.broadcast %0 : vector<16x1xi32> to vector<16x64xi32>
    %3 = arith.cmpi eq, %1, %2 : vector<16x64xi32>
    %4 = arith.extui %3 : vector<16x64xi1> to vector<16x64xi32>
    %5 = arith.sitofp %4 : vector<16x64xi32> to vector<16x64xf32>
    %c16 = arith.constant 16 : index
    %c0_1 = arith.constant 0 : index
    %6 = vector.load %arg3[%c16, %c0_1] : memref<80x128xf32, #tpu.memory_space<vmem>>, vector<64x32xf32>
    %cst = arith.constant dense<0.000000e+00> : vector<16x32xf32>
    %7 = tpu.matmul %5, %6, %cst {dimension_numbers = #tpu.dot_dimension_numbers<[1], [0], [0], [1], [0, 0, 1, 1], [], []>} : vector<16x64xf32>, vector<64x32xf32>, vector<16x32xf32> -> vector<16x32xf32>
    %8 = arith.truncf %7 : vector<16x32xf32> to vector<16x32xbf16>
    %c0_2 = arith.constant 0 : index
    %c0_3 = arith.constant 0 : index
    %9 = vector.load %arg2[%c0_2, %c0_3] : memref<160x128xbf16, #tpu.memory_space<vmem>>, vector<32x64xbf16>
    %cst_4 = arith.constant dense<0.000000e+00> : vector<16x64xf32>
    %10 = tpu.matmul %8, %9, %cst_4 {dimension_numbers = #tpu.dot_dimension_numbers<[1], [0], [0], [1], [0, 0, 1, 1], [], []>} : vector<16x32xbf16>, vector<32x64xbf16>, vector<16x64xf32> -> vector<16x64xf32>
    %11 = vector.extract_strided_slice %10 {offsets = [0, 0], sizes = [16, 32], strides = [1, 1]} : vector<16x64xf32> to vector<16x32xf32>
    %12 = arith.truncf %11 : vector<16x32xf32> to vector<16x32xbf16>
    %13 = vector.extract_strided_slice %10 {offsets = [0, 32], sizes = [16, 32], strides = [1, 1]} : vector<16x64xf32> to vector<16x32xf32>
    %14 = arith.truncf %13 : vector<16x32xf32> to vector<16x32xbf16>
    %cst_5 = arith.constant dense<0.000000e+00> : vector<16x16xf32>
    %15 = tpu.matmul %12, %8, %cst_5 {dimension_numbers = #tpu.dot_dimension_numbers<[1], [1], [0], [0], [0, 0, 1, 0], [], []>} : vector<16x32xbf16>, vector<16x32xbf16>, vector<16x16xf32> -> vector<16x16xf32>
    %cst_6 = arith.constant 0.176776692 : f32
    %16 = vector.broadcast %cst_6 : f32 to vector<16x16xf32>
    %17 = arith.mulf %15, %16 : vector<16x16xf32>
    %c0_7 = arith.constant 0 : index
    %c0_8 = arith.constant 0 : index
    %18 = vector.load %arg0[%c0_7, %c0_8] : memref<16x16xf32, #tpu.memory_space<vmem>>, vector<16x16xf32>
    %19 = arith.addf %17, %18 : vector<16x16xf32>
    %cst_9 = arith.constant dense<0xFF800000> : vector<16xf32>
    %20 = vector.multi_reduction <maximumf>, %19, %cst_9 [1] : vector<16x16xf32> to vector<16xf32>
    %21 = vector.shape_cast %20 : vector<16xf32> to vector<16x1xf32>
    %22 = vector.broadcast %21 : vector<16x1xf32> to vector<16x16xf32>
    %23 = arith.subf %19, %22 : vector<16x16xf32>
    %24 = math.exp %23 : vector<16x16xf32>
    %cst_10 = arith.constant dense<0.000000e+00> : vector<16xf32>
    %25 = vector.multi_reduction <add>, %24, %cst_10 [1] : vector<16x16xf32> to vector<16xf32>
    %26 = vector.shape_cast %25 : vector<16xf32> to vector<16x1xf32>
    %27 = tpu.reciprocal %26 {approx = true} : vector<16x1xf32> -> vector<16x1xf32>
    %28 = vector.broadcast %27 : vector<16x1xf32> to vector<16x16xf32>
    %29 = arith.mulf %24, %28 : vector<16x16xf32>
    %30 = arith.truncf %29 : vector<16x16xf32> to vector<16x16xbf16>
    %cst_11 = arith.constant dense<0.000000e+00> : vector<16x32xf32>
    %31 = tpu.matmul %30, %14, %cst_11 {dimension_numbers = #tpu.dot_dimension_numbers<[1], [0], [0], [1], [0, 0, 1, 1], [], []>} : vector<16x16xbf16>, vector<16x32xbf16>, vector<16x32xf32> -> vector<16x32xf32>
    %32 = arith.addf %7, %31 : vector<16x32xf32>
    %c0_12 = arith.constant 0 : index
    %c0_13 = arith.constant 0 : index
    %33 = vector.load %arg3[%c0_12, %c0_13] : memref<80x128xf32, #tpu.memory_space<vmem>>, vector<1x32xf32>
    %c1 = arith.constant 1 : index
    %c0_14 = arith.constant 0 : index
    %34 = vector.load %arg3[%c1, %c0_14] : memref<80x128xf32, #tpu.memory_space<vmem>>, vector<1x32xf32>
    %cst_15 = arith.constant dense<0.000000e+00> : vector<16xf32>
    %35 = vector.multi_reduction <add>, %32, %cst_15 [1] : vector<16x32xf32> to vector<16xf32>
    %36 = vector.shape_cast %35 : vector<16xf32> to vector<16x1xf32>
    %cst_16 = arith.constant 3.200000e+01 : f32
    %37 = vector.broadcast %cst_16 : f32 to vector<16x1xf32>
    %38 = arith.divf %36, %37 : vector<16x1xf32>
    %39 = vector.broadcast %38 : vector<16x1xf32> to vector<16x32xf32>
    %40 = arith.subf %32, %39 : vector<16x32xf32>
    %41 = vector.broadcast %38 : vector<16x1xf32> to vector<16x32xf32>
    %42 = arith.subf %32, %41 : vector<16x32xf32>
    %43 = arith.mulf %40, %42 : vector<16x32xf32>
    %cst_17 = arith.constant dense<0.000000e+00> : vector<16xf32>
    %44 = vector.multi_reduction <add>, %43, %cst_17 [1] : vector<16x32xf32> to vector<16xf32>
    %45 = vector.shape_cast %44 : vector<16xf32> to vector<16x1xf32>
    %cst_18 = arith.constant 3.200000e+01 : f32
    %46 = vector.broadcast %cst_18 : f32 to vector<16x1xf32>
    %47 = arith.divf %45, %46 : vector<16x1xf32>
    %48 = vector.broadcast %38 : vector<16x1xf32> to vector<16x32xf32>
    %49 = arith.subf %32, %48 : vector<16x32xf32>
    %cst_19 = arith.constant 9.99999997E-7 : f32
    %50 = vector.broadcast %cst_19 : f32 to vector<16x1xf32>
    %51 = arith.addf %47, %50 : vector<16x1xf32>
    %52 = math.rsqrt %51 : vector<16x1xf32>
    %53 = vector.broadcast %52 : vector<16x1xf32> to vector<16x32xf32>
    %54 = arith.mulf %49, %53 : vector<16x32xf32>
    %55 = vector.broadcast %33 : vector<1x32xf32> to vector<16x32xf32>
    %56 = arith.mulf %54, %55 : vector<16x32xf32>
    %57 = vector.broadcast %34 : vector<1x32xf32> to vector<16x32xf32>
    %58 = arith.addf %56, %57 : vector<16x32xf32>
    %59 = arith.truncf %58 : vector<16x32xf32> to vector<16x32xbf16>
    %c32 = arith.constant 32 : index
    %c0_20 = arith.constant 0 : index
    %60 = vector.load %arg2[%c32, %c0_20] : memref<160x128xbf16, #tpu.memory_space<vmem>>, vector<32x64xbf16>
    %cst_21 = arith.constant dense<0.000000e+00> : vector<16x64xf32>
    %61 = tpu.matmul %59, %60, %cst_21 {dimension_numbers = #tpu.dot_dimension_numbers<[1], [0], [0], [1], [0, 0, 1, 1], [], []>} : vector<16x32xbf16>, vector<32x64xbf16>, vector<16x64xf32> -> vector<16x64xf32>
    %cst_22 = arith.constant 0.000000e+00 : f32
    %62 = vector.broadcast %cst_22 : f32 to vector<16x64xf32>
    %63 = arith.maximumf %61, %62 : vector<16x64xf32>
    %64 = arith.truncf %63 : vector<16x64xf32> to vector<16x64xbf16>
    %c64 = arith.constant 64 : index
    %c0_23 = arith.constant 0 : index
    %65 = vector.load %arg2[%c64, %c0_23] : memref<160x128xbf16, #tpu.memory_space<vmem>>, vector<64x32xbf16>
    %cst_24 = arith.constant dense<0.000000e+00> : vector<16x32xf32>
    %66 = tpu.matmul %64, %65, %cst_24 {dimension_numbers = #tpu.dot_dimension_numbers<[1], [0], [0], [1], [0, 0, 1, 1], [], []>} : vector<16x64xbf16>, vector<64x32xbf16>, vector<16x32xf32> -> vector<16x32xf32>
    %67 = arith.addf %58, %66 : vector<16x32xf32>
    %c2 = arith.constant 2 : index
    %c0_25 = arith.constant 0 : index
    %68 = vector.load %arg3[%c2, %c0_25] : memref<80x128xf32, #tpu.memory_space<vmem>>, vector<1x32xf32>
    %c3 = arith.constant 3 : index
    %c0_26 = arith.constant 0 : index
    %69 = vector.load %arg3[%c3, %c0_26] : memref<80x128xf32, #tpu.memory_space<vmem>>, vector<1x32xf32>
    %cst_27 = arith.constant dense<0.000000e+00> : vector<16xf32>
    %70 = vector.multi_reduction <add>, %67, %cst_27 [1] : vector<16x32xf32> to vector<16xf32>
    %71 = vector.shape_cast %70 : vector<16xf32> to vector<16x1xf32>
    %cst_28 = arith.constant 3.200000e+01 : f32
    %72 = vector.broadcast %cst_28 : f32 to vector<16x1xf32>
    %73 = arith.divf %71, %72 : vector<16x1xf32>
    %74 = vector.broadcast %73 : vector<16x1xf32> to vector<16x32xf32>
    %75 = arith.subf %67, %74 : vector<16x32xf32>
    %76 = vector.broadcast %73 : vector<16x1xf32> to vector<16x32xf32>
    %77 = arith.subf %67, %76 : vector<16x32xf32>
    %78 = arith.mulf %75, %77 : vector<16x32xf32>
    %cst_29 = arith.constant dense<0.000000e+00> : vector<16xf32>
    %79 = vector.multi_reduction <add>, %78, %cst_29 [1] : vector<16x32xf32> to vector<16xf32>
    %80 = vector.shape_cast %79 : vector<16xf32> to vector<16x1xf32>
    %cst_30 = arith.constant 3.200000e+01 : f32
    %81 = vector.broadcast %cst_30 : f32 to vector<16x1xf32>
    %82 = arith.divf %80, %81 : vector<16x1xf32>
    %83 = vector.broadcast %73 : vector<16x1xf32> to vector<16x32xf32>
    %84 = arith.subf %67, %83 : vector<16x32xf32>
    %cst_31 = arith.constant 9.99999997E-7 : f32
    %85 = vector.broadcast %cst_31 : f32 to vector<16x1xf32>
    %86 = arith.addf %82, %85 : vector<16x1xf32>
    %87 = math.rsqrt %86 : vector<16x1xf32>
    %88 = vector.broadcast %87 : vector<16x1xf32> to vector<16x32xf32>
    %89 = arith.mulf %84, %88 : vector<16x32xf32>
    %90 = vector.broadcast %68 : vector<1x32xf32> to vector<16x32xf32>
    %91 = arith.mulf %89, %90 : vector<16x32xf32>
    %92 = vector.broadcast %69 : vector<1x32xf32> to vector<16x32xf32>
    %93 = arith.addf %91, %92 : vector<16x32xf32>
    %94 = arith.truncf %93 : vector<16x32xf32> to vector<16x32xbf16>
    %c128 = arith.constant 128 : index
    %c0_32 = arith.constant 0 : index
    %95 = vector.load %arg2[%c128, %c0_32] : memref<160x128xbf16, #tpu.memory_space<vmem>>, vector<32x128xbf16>
    %cst_33 = arith.constant dense<0.000000e+00> : vector<16x128xf32>
    %96 = tpu.matmul %94, %95, %cst_33 {dimension_numbers = #tpu.dot_dimension_numbers<[1], [0], [0], [1], [0, 0, 1, 1], [], []>} : vector<16x32xbf16>, vector<32x128xbf16>, vector<16x128xf32> -> vector<16x128xf32>
    %c8 = arith.constant 8 : index
    %c0_34 = arith.constant 0 : index
    %97 = vector.load %arg3[%c8, %c0_34] : memref<80x128xf32, #tpu.memory_space<vmem>>, vector<1x128xf32>
    %98 = vector.broadcast %97 : vector<1x128xf32> to vector<16x128xf32>
    %99 = arith.addf %96, %98 : vector<16x128xf32>
    %c0_35 = arith.constant 0 : index
    %c0_36 = arith.constant 0 : index
    %100 = vector.load %arg4[%c0_35, %c0_36] : memref<16x128xf32, #tpu.memory_space<vmem>>, vector<16x128xf32>
    tpu.vector_store %arg4[%c0_35, %c0_36], %99 {strides = array<i32>} : memref<16x128xf32, #tpu.memory_space<vmem>>, vector<16x128xf32>,
    return
  }
}

</mosaic_0001>

<llo_original>
// kernel: teacher_forward.1
$region0: #{teacher_forward.1}
  #allocation0 [shape = 'u32[]', space=smem, size = 0x4, offset = 0x4, fixed_abs, tag = 'smem constant byte address 0x4 - core index']
  #allocation1 [shape = 'u32[72,128]{1,0:T(1,128)}', space=vmem, size = 0x9000, scoped, tag = 'internal scratch']
  %s0 = inlined_call_operand.vmem [shape: f32[16,16], index: 0, kind: input, shape index: {}]
  %s1 = inlined_call_operand.vmem [shape: s32[16,1], index: 1, kind: input, shape index: {}]
  %s2 = inlined_call_operand.hbm [shape: bf16[160,128], index: 2, kind: input, shape index: {}]
  %s3 = inlined_call_operand.hbm [shape: f32[80,128], index: 3, kind: input, shape index: {}]
  %s4 = inlined_call_operand.vmem [shape: f32[16,128], index: 4, kind: output, shape index: {}]
  %s5 = sld [smem:[#allocation0]]
  $region34: #{teacher_forward.1} parent=0
    _
  %s7 = ssub.s32 1, %s5
  %s8 = scalar_select 0, %s7, %s5
  $region1: #{teacher_forward.1} parent=0
    #allocation2 [shape = 'u8[40960]{0}', space=vmem, size = 0xa000, scoped, tag = 'input window, operand 2, single buffered']
    #allocation3 [shape = 's32[1]{0}', space=sflag, size = 0x4, scoped, tag = 'scoped memory for teacher_forward.1']
    #allocation4 [shape = 'u8[40960]{0}', space=vmem, size = 0xa000, scoped, tag = 'input window, operand 3, single buffered']
    #allocation5 [shape = 's32[1]{0}', space=sflag, size = 0x4, scoped, tag = 'scoped memory for teacher_forward.1']
    %9 = vsyncpa [#allocation3], 0
    %10 = vsyncpa [#allocation5], 0
    // Predicated region
    $region2: #{teacher_forward.1} parent=1 // pred_check
      _
    $region3: #{teacher_forward.1} parent=1 // pred_check_branch
      %12 = sbr.rel (0) target = $region5
    $region4: #{teacher_forward.1} parent=1 // pred_region
      _
    $region5: #{teacher_forward.1} parent=1 // pred_fallthru
      _
    // Predicated region
    $region6: #{teacher_forward.1} parent=1 // pred_check
      _
    $region7: #{teacher_forward.1} parent=1 // pred_check_branch
      %14 = sbr.rel (0) target = $region9
    $region8: #{teacher_forward.1} parent=1 // pred_region
      _
    $region9: #{teacher_forward.1} parent=1 // pred_fallthru
      _
    // Predicated region
    $region10: #{teacher_forward.1} parent=1 // pred_check
      _
    $region11: #{teacher_forward.1} parent=1 // pred_check_branch
      %16 = sbr.rel (0) target = $region13
    $region12: #{teacher_forward.1} parent=1 // pred_region
      %18 = vsyncadd [#allocation3], 0
      %s19 = sshll.u32 %s2, 4
      %s20 = int_to_ptr.hbm [resolvable:$true] %s19
      %s21 = sshll.u32 [#allocation2], 4
      %s22 = int_to_ptr.vmem [resolvable:$true] %s21
      %27 = dma.hbm_to_vmem [thread:$0]  %s20, 1280, %s22, [#allocation3], 64, 64, 4
    $region13: #{teacher_forward.1} parent=1 // pred_fallthru
      _
    // Predicated region
    $region14: #{teacher_forward.1} parent=1 // pred_check
      _
    $region15: #{teacher_forward.1} parent=1 // pred_check_branch
      %29 = sbr.rel (0) target = $region17
    $region16: #{teacher_forward.1} parent=1 // pred_region
      %31 = vsyncadd [#allocation5], 0
      %s32 = sshll.u32 %s3, 4
      %s33 = int_to_ptr.hbm [resolvable:$true] %s32
      %s34 = sshll.u32 [#allocation4], 4
      %s35 = int_to_ptr.vmem [resolvable:$true] %s34
      %40 = dma.hbm_to_vmem [thread:$0]  %s33, 1280, %s35, [#allocation5], 128, 128, 8
    $region17: #{teacher_forward.1} parent=1 // pred_fallthru
      _
    // Predicated region
    $region18: #{teacher_forward.1} parent=1 // pred_check
      _
    $region19: #{teacher_forward.1} parent=1 // pred_check_branch
      %42 = sbr.rel (0) target = $region21
    $region20: #{teacher_forward.1} parent=1 // pred_region
      %44 = dma.done [#allocation3], 1280
    $region21: #{teacher_forward.1} parent=1 // pred_fallthru
      _
    // Predicated region
    $region22: #{teacher_forward.1} parent=1 // pred_check
      _
    $region23: #{teacher_forward.1} parent=1 // pred_check_branch
      %46 = sbr.rel (0) target = $region25
    $region24: #{teacher_forward.1} parent=1 // pred_region
      %48 = dma.done [#allocation5], 1280
    $region25: #{teacher_forward.1} parent=1 // pred_fallthru
      _
    %v50 = vld [vmem:[%s1] sm:$0xff]
    %v51 = vld [vmem:[%s1 + $0x8] sm:$0xff]
    %v52 = vlaneseq
    %v53 = vand.u32 %v52, 127
    %54 = vset.pattern.permute.xlu0 0
    %55 = vperm.xlu0 %54, %v50
    %v56 = vpop.permute.xlu0 %55
    %57 = vset.pattern.permute.xlu0 0
    %58 = vperm.xlu0 %57, %v51
    %v59 = vpop.permute.xlu0 %58
    %vm60 = vcmp.eq.s32.totalorder %v53, %v56
    %vm61 = vcmp.eq.s32.totalorder %v53, %v59
    %v62 = vsel %vm60, 1, 0
    %v63 = vsel %vm61, 1, 0
    %v64 = vcvt.s32.f32 %v62
    %v65 = vcvt.s32.f32 %v63
    %v66 = vld [vmem:[#allocation4 + $0x10] sm:$0xff]
    %v67 = vld [vmem:[#allocation4 + $0x18] sm:$0xff]
    %v68 = vld [vmem:[#allocation4 + $0x20] sm:$0xff]
    %v69 = vld [vmem:[#allocation4 + $0x28] sm:$0xff]
    %v70 = vld [vmem:[#allocation4 + $0x30] sm:$0xff]
    %v71 = vld [vmem:[#allocation4 + $0x38] sm:$0xff]
    %v72 = vld [vmem:[#allocation4 + $0x40] sm:$0xff]
    %v73 = vld [vmem:[#allocation4 + $0x48] sm:$0xff]
    %vm74 = vcmask 523264
    %v76 = vsel %vm74, %v64, 0
    %v79 = vsel %vm74, %v65, 0
    %81 = vmatpush.msra.mxu0 0.0
    %82 = vmatpush.msra.mxu0 0.0
    %83 = vmatpush.msra.mxu0 0.0
    %84 = vmatpush.msra.mxu0 0.0
    %85 = vmatpush.msra.mxu0 0.0
    %86 = vmatpush.msra.mxu0 0.0
    %87 = vmatpush.msra.mxu0 0.0
    %88 = vmatpush.msra.mxu0 0.0
    %89 = vmatpush.msra.mxu0 %v73
    %90 = vmatpush.msra.mxu0 %v72
    %91 = vmatpush.msra.mxu0 %v71
    %92 = vmatpush.msra.mxu0 %v70
    %93 = vmatpush.msra.mxu0 %v69
    %94 = vmatpush.msra.mxu0 %v68
    %95 = vmatpush.msra.mxu0 %v67
    %96 = vmatpush.msra.mxu0 %v66
    %97 = vmatmul.f32.gmra.mxu0 %v76
    %v98 = vpop.f32.mrf.mxu0
    %v99 = vadd.f32 0.0, %v98
    %100 = vmatmul.f32.gmra.mxu0 %v79
    %v101 = vpop.f32.mrf.mxu0
    %v102 = vadd.f32 0.0, %v101
    %103 = vdwg.mxu0
    %v104 = vpack.c.bf16 %v102, %v99
    %v105 = vld [vmem:[#allocation2] sm:$0xf]
    %v106 = vld [vmem:[#allocation2 + $0x4] sm:$0xf]
    %v107 = vld [vmem:[#allocation2 + $0x8] sm:$0xf]
    %v108 = vld [vmem:[#allocation2 + $0xc] sm:$0xf]
    %v113 = vunpack.c.l.b16 %v105
    %v114 = vunpack.c.l.b16 %v106
    %v115 = vunpack.c.l.b16 %v107
    %v116 = vunpack.c.l.b16 %v108
    %v117 = vpack.c.b16 %v114, %v113
    %v118 = vpack.c.b16 %v116, %v115
    %vm121 = vcmask 261120
    %v123 = vsel %vm121, %v104, 0
    %125 = vmatpush.bf16.msra.mxu0 0
    %126 = vmatpush.bf16.msra.mxu0 0
    %127 = vmatpush.bf16.msra.mxu0 0
    %128 = vmatpush.bf16.msra.mxu0 0
    %129 = vmatpush.bf16.msra.mxu0 0
    %130 = vmatpush.bf16.msra.mxu0 0
    %131 = vmatpush.bf16.msra.mxu0 %v118
    %132 = vmatpush.bf16.msra.mxu0 %v117
    %133 = vmatmul.bf16.gmra.mxu0 %v123
    %v134 = vpop.f32.mrf.mxu0
    %v135 = vadd.f32 0.0, %v134
    %v136 = vpop.f32.mrf.mxu0
    %v137 = vadd.f32 0.0, %v136
    %138 = vdwg.mxu0
    %v139 = vpack.c.bf16 %v137, %v135
    %v141 = vsel %vm121, %v139, 0
    %143 = vmatpush.bf16.xpose.msra.mxu0 0
    %144 = vmatpush.bf16.xpose.msra.mxu0 0
    %145 = vmatpush.bf16.xpose.msra.mxu0 0
    %146 = vmatpush.bf16.xpose.msra.mxu0 0
    %147 = vmatpush.bf16.xpose.msra.mxu0 0
    %148 = vmatpush.bf16.xpose.msra.mxu0 0
    %149 = vmatpush.bf16.xpose.msra.mxu0 0
    %150 = vmatpush.bf16.xpose.msra.mxu0 %v123
    %151 = vmatmul.bf16.gmra.mxu0 %v141
    %v152 = vpop.f32.mrf.mxu0
    %v153 = vadd.f32 0.0, %v152
    %v154 = vpop.f32.mrf.mxu0
    %v155 = vadd.f32 0.0, %v154
    %156 = vdwg.mxu0
    %v157 = vmul.f32 %v153, 0.17677669
    %v158 = vmul.f32 %v155, 0.17677669
    %v159 = vld [vmem:[%s0] sm:$0xff]
    %v160 = vld [vmem:[%s0 + $0x8] sm:$0xff]
    %v161 = vadd.f32 %v157, %v159
    %v162 = vadd.f32 %v158, %v160
    %vm163 = vcmask 130048
    %v164 = vsel %vm163, %v161, -inf
    %165 = vmax.xlane.f32.xlu0 %v164
    %v166 = vpop.xlane.xlu0 %165
    %v167 = vsel %vm163, %v162, -inf
    %168 = vmax.xlane.f32.xlu0 %v167
    %v169 = vpop.xlane.xlu0 %168
    %v170 = vsub.f32 %v161, %v166
    %v171 = vsub.f32 %v162, %v169
    %v172 = vmul.f32 %v170, 1.442695
    %v173 = vpow.pop %v172
    %v174 = vmul.f32 %v171, 1.442695
    %v175 = vpow.pop %v174
    %v176 = vsel %vm163, %v173, 0.0
    %177 = vadd.xlane.f32.xlu0 %v176
    %v178 = vpop.xlane.xlu0 %177
    %v179 = vsel %vm163, %v175, 0.0
    %180 = vadd.xlane.f32.xlu0 %v179
    %v181 = vpop.xlane.xlu0 %180
    %v182 = vrcp.pop %v178
    %v183 = vrcp.pop %v181
    %v184 = vmul.f32 %v173, %v182
    %v185 = vmul.f32 %v175, %v183
    %v186 = vpack.c.bf16 %v185, %v184
    %188 = vrot.lane.b32.xlu0 %v139, 96
    %v189 = vpop.permute.xlu0 %188
    %v192 = vsel %vm163, %v186, 0
    %194 = vmatpush.bf16.msra.mxu0 0
    %195 = vmatpush.bf16.msra.mxu0 0
    %196 = vmatpush.bf16.msra.mxu0 0
    %197 = vmatpush.bf16.msra.mxu0 0
    %198 = vmatpush.bf16.msra.mxu0 0
    %199 = vmatpush.bf16.msra.mxu0 0
    %200 = vmatpush.bf16.msra.mxu0 0
    %201 = vmatpush.bf16.msra.mxu0 %v189
    %202 = vmatmul.bf16.gmra.mxu0 %v192
    %v203 = vpop.f32.mrf.mxu0
    %v204 = vadd.f32 0.0, %v203
    %v205 = vpop.f32.mrf.mxu0
    %v206 = vadd.f32 0.0, %v205
    %207 = vdwg.mxu0
    %v208 = vadd.f32 %v99, %v204
    %v209 = vadd.f32 %v102, %v206
    %v210 = vld [vmem:[#allocation4] sm:$0x1]
    %v211 = vld [vmem:[#allocation4 + $0x1] sm:$0x1]
    %v212 = vsel %vm121, %v208, 0.0
    %213 = vadd.xlane.f32.xlu0 %v212
    %v214 = vpop.xlane.xlu0 %213
    %v215 = vsel %vm121, %v209, 0.0
    %216 = vadd.xlane.f32.xlu0 %v215
    %v217 = vpop.xlane.xlu0 %216
    %v218 = vrcp.pop 32.0
    %v219 = vmul.f32 32.0, %v218
    %v220 = vsub.f32 1.0, %v219
    %v221 = vmul.f32 %v218, %v220
    %v222 = vadd.f32 %v218, %v221
    %vm223 = vweird.f32 %v218
    %v224 = vsel %vm223, %v218, %v222
    %v225 = vmul.f32 %v214, %v224
    %v226 = vmul.f32 %v217, %v224
    %v227 = vsub.f32 %v208, %v225
    %v228 = vsub.f32 %v209, %v226
    %v229 = vmul.f32 %v227, %v227
    %v230 = vmul.f32 %v228, %v228
    %v231 = vsel %vm121, %v229, 0.0
    %232 = vadd.xlane.f32.xlu0 %v231
    %v233 = vpop.xlane.xlu0 %232
    %v234 = vsel %vm121, %v230, 0.0
    %235 = vadd.xlane.f32.xlu0 %v234
    %v236 = vpop.xlane.xlu0 %235
    %v237 = vmul.f32 %v233, %v224
    %v238 = vmul.f32 %v236, %v224
    %v239 = vadd.f32 %v237, 1e-06
    %v240 = vadd.f32 %v238, 1e-06
    %v241 = vrsqrt.pop %v239
    %v242 = vmul.f32 %v241, %v239
    %v243 = vmul.f32 %v242, %v241
    %v244 = vmul.f32 0.5, %v243
    %v245 = vsub.f32 1.5, %v244
    %v246 = vmul.f32 %v241, %v245
    %vm247 = vweird.f32 %v239
    %vm248 = vweird.f32 %v241
    %vm249 = vmor %vm247, %vm248
    %v250 = vsel %vm249, %v241, %v246
    %v251 = vrsqrt.pop %v240
    %v252 = vmul.f32 %v251, %v240
    %v253 = vmul.f32 %v252, %v251
    %v254 = vmul.f32 0.5, %v253
    %v255 = vsub.f32 1.5, %v254
    %v256 = vmul.f32 %v251, %v255
    %vm257 = vweird.f32 %v240
    %vm258 = vweird.f32 %v251
    %vm259 = vmor %vm257, %vm258
    %v260 = vsel %vm259, %v251, %v256
    %v261 = vmul.f32 %v227, %v250
    %v262 = vmul.f32 %v228, %v260
    %v263 = vperm.slane %v210, 0
    %v264 = vmul.f32 %v261, %v263
    %v265 = vmul.f32 %v262, %v263
    %v266 = vperm.slane %v211, 0
    %v267 = vadd.f32 %v264, %v266
    %v268 = vadd.f32 %v265, %v266
    %v269 = vpack.c.bf16 %v268, %v267
    %v270 = vld [vmem:[#allocation2 + $0x10] sm:$0xf]
    %v271 = vld [vmem:[#allocation2 + $0x14] sm:$0xf]
    %v272 = vld [vmem:[#allocation2 + $0x18] sm:$0xf]
    %v273 = vld [vmem:[#allocation2 + $0x1c] sm:$0xf]
    %v278 = vunpack.c.l.b16 %v270
    %v279 = vunpack.c.l.b16 %v271
    %v280 = vunpack.c.l.b16 %v272
    %v281 = vunpack.c.l.b16 %v273
    %v282 = vpack.c.b16 %v279, %v278
    %v283 = vpack.c.b16 %v281, %v280
    %v287 = vsel %vm121, %v269, 0
    %289 = vmatpush.bf16.msra.mxu0 0
    %290 = vmatpush.bf16.msra.mxu0 0
    %291 = vmatpush.bf16.msra.mxu0 0
    %292 = vmatpush.bf16.msra.mxu0 0
    %293 = vmatpush.bf16.msra.mxu0 0
    %294 = vmatpush.bf16.msra.mxu0 0
    %295 = vmatpush.bf16.msra.mxu0 %v283
    %296 = vmatpush.bf16.msra.mxu0 %v282
    %297 = vmatmul.bf16.gmra.mxu0 %v287
    %v298 = vpop.f32.mrf.mxu0
    %v299 = vadd.f32 0.0, %v298
    %v300 = vpop.f32.mrf.mxu0
    %v301 = vadd.f32 0.0, %v300
    %302 = vdwg.mxu0
    %v303 = vmax.f32 %v299, 0.0
    %v304 = vmax.f32 %v301, 0.0
    %v305 = vpack.c.bf16 %v304, %v303
    %v306 = vld [vmem:[#allocation2 + $0x20] sm:$0xf]
    %v307 = vld [vmem:[#allocation2 + $0x24] sm:$0xf]
    %v308 = vld [vmem:[#allocation2 + $0x28] sm:$0xf]
    %v309 = vld [vmem:[#allocation2 + $0x2c] sm:$0xf]
    %v310 = vld [vmem:[#allocation2 + $0x30] sm:$0xf]
    %v311 = vld [vmem:[#allocation2 + $0x34] sm:$0xf]
    %v312 = vld [vmem:[#allocation2 + $0x38] sm:$0xf]
    %v313 = vld [vmem:[#allocation2 + $0x3c] sm:$0xf]
    %v322 = vunpack.c.l.b16 %v306
    %v323 = vunpack.c.l.b16 %v307
    %v324 = vunpack.c.l.b16 %v308
    %v325 = vunpack.c.l.b16 %v309
    %v326 = vunpack.c.l.b16 %v310
    %v327 = vunpack.c.l.b16 %v311
    %v328 = vunpack.c.l.b16 %v312
    %v329 = vunpack.c.l.b16 %v313
    %v330 = vpack.c.b16 %v323, %v322
    %v331 = vpack.c.b16 %v325, %v324
    %v332 = vpack.c.b16 %v327, %v326
    %v333 = vpack.c.b16 %v329, %v328
    %v339 = vsel %vm74, %v305, 0
    %341 = vmatpush.bf16.msra.mxu0 0
    %342 = vmatpush.bf16.msra.mxu0 0
    %343 = vmatpush.bf16.msra.mxu0 0
    %344 = vmatpush.bf16.msra.mxu0 0
    %345 = vmatpush.bf16.msra.mxu0 %v333
    %346 = vmatpush.bf16.msra.mxu0 %v332
    %347 = vmatpush.bf16.msra.mxu0 %v331
    %348 = vmatpush.bf16.msra.mxu0 %v330
    %349 = vmatmul.bf16.gmra.mxu0 %v339
    %v350 = vpop.f32.mrf.mxu0
    %v351 = vadd.f32 0.0, %v350
    %v352 = vpop.f32.mrf.mxu0
    %v353 = vadd.f32 0.0, %v352
    %354 = vdwg.mxu0
    %v355 = vadd.f32 %v267, %v351
    %v356 = vadd.f32 %v268, %v353
    %v357 = vld [vmem:[#allocation4 + $0x2] sm:$0x1]
    %v358 = vld [vmem:[#allocation4 + $0x3] sm:$0x1]
    %v359 = vsel %vm121, %v355, 0.0
    %360 = vadd.xlane.f32.xlu0 %v359
    %v361 = vpop.xlane.xlu0 %360
    %v362 = vsel %vm121, %v356, 0.0
    %363 = vadd.xlane.f32.xlu0 %v362
    %v364 = vpop.xlane.xlu0 %363
    %v365 = vmul.f32 %v361, %v224
    %v366 = vmul.f32 %v364, %v224
    %v367 = vsub.f32 %v355, %v365
    %v368 = vsub.f32 %v356, %v366
    %v369 = vmul.f32 %v367, %v367
    %v370 = vmul.f32 %v368, %v368
    %v371 = vsel %vm121, %v369, 0.0
    %372 = vadd.xlane.f32.xlu0 %v371
    %v373 = vpop.xlane.xlu0 %372
    %v374 = vsel %vm121, %v370, 0.0
    %375 = vadd.xlane.f32.xlu0 %v374
    %v376 = vpop.xlane.xlu0 %375
    %v377 = vmul.f32 %v373, %v224
    %v378 = vmul.f32 %v376, %v224
    %v379 = vadd.f32 %v377, 1e-06
    %v380 = vadd.f32 %v378, 1e-06
    %v381 = vrsqrt.pop %v379
    %v382 = vmul.f32 %v381, %v379
    %v383 = vmul.f32 %v382, %v381
    %v384 = vmul.f32 0.5, %v383
    %v385 = vsub.f32 1.5, %v384
    %v386 = vmul.f32 %v381, %v385
    %vm387 = vweird.f32 %v379
    %vm388 = vweird.f32 %v381
    %vm389 = vmor %vm387, %vm388
    %v390 = vsel %vm389, %v381, %v386
    %v391 = vrsqrt.pop %v380
    %v392 = vmul.f32 %v391, %v380
    %v393 = vmul.f32 %v392, %v391
    %v394 = vmul.f32 0.5, %v393
    %v395 = vsub.f32 1.5, %v394
    %v396 = vmul.f32 %v391, %v395
    %vm397 = vweird.f32 %v380
    %vm398 = vweird.f32 %v391
    %vm399 = vmor %vm397, %vm398
    %v400 = vsel %vm399, %v391, %v396
    %v401 = vmul.f32 %v367, %v390
    %v402 = vmul.f32 %v368, %v400
    %v403 = vperm.slane %v357, 0
    %v404 = vmul.f32 %v401, %v403
    %v405 = vmul.f32 %v402, %v403
    %v406 = vperm.slane %v358, 0
    %v407 = vadd.f32 %v404, %v406
    %v408 = vadd.f32 %v405, %v406
    %v409 = vpack.c.bf16 %v408, %v407
    %v410 = vld [vmem:[#allocation2 + $0x40] sm:$0xf]
    %v411 = vld [vmem:[#allocation2 + $0x44] sm:$0xf]
    %v412 = vld [vmem:[#allocation2 + $0x48] sm:$0xf]
    %v413 = vld [vmem:[#allocation2 + $0x4c] sm:$0xf]
    %v414 = vld [vmem:[#allocation4 + $0x8] sm:$0x1]
    %v415 = vperm.slane %v414, 0
    %v420 = vunpack.c.l.b16 %v410
    %v421 = vunpack.c.l.b16 %v411
    %v422 = vunpack.c.l.b16 %v412
    %v423 = vunpack.c.l.b16 %v413
    %v424 = vpack.c.b16 %v421, %v420
    %v425 = vpack.c.b16 %v423, %v422
    %v429 = vsel %vm121, %v409, 0
    %431 = vmatpush.bf16.msra.mxu0 0
    %432 = vmatpush.bf16.msra.mxu0 0
    %433 = vmatpush.bf16.msra.mxu0 0
    %434 = vmatpush.bf16.msra.mxu0 0
    %435 = vmatpush.bf16.msra.mxu0 0
    %436 = vmatpush.bf16.msra.mxu0 0
    %437 = vmatpush.bf16.msra.mxu0 %v425
    %438 = vmatpush.bf16.msra.mxu0 %v424
    %439 = vmatmul.bf16.gmra.mxu0 %v429
    %v440 = vpop.f32.mrf.mxu0
    %v441 = vadd.f32 %v415, %v440
    %v442 = vpop.f32.mrf.mxu0
    %v443 = vadd.f32 %v415, %v442
    %444 = vdwg.mxu0
    %445 = vst [vmem:[%s4] sm:$0xff] %v441
    %446 = vst [vmem:[%s4 + $0x8] sm:$0xff] %v443
    // Predicated region
    $region26: #{teacher_forward.1} parent=1 // pred_check
      _
    $region27: #{teacher_forward.1} parent=1 // pred_check_branch
      %448 = sbr.rel (0) target = $region29
    $region28: #{teacher_forward.1} parent=1 // pred_region
      _
    $region29: #{teacher_forward.1} parent=1 // pred_fallthru
      _
    // Predicated region
    $region30: #{teacher_forward.1} parent=1 // pred_check
      _
    $region31: #{teacher_forward.1} parent=1 // pred_check_branch
      %450 = sbr.rel (0) target = $region33
    $region32: #{teacher_forward.1} parent=1 // pred_region
      _
    $region33: #{teacher_forward.1} parent=1 // pred_fallthru
      _
    %451 = vsyncpa [#allocation3], 1
    %452 = vsyncpa [#allocation5], 1

</llo_original>
